<compile_context>
chip_gen: v7x
topology: tpu7x:2x2x1
jax: 0.10.0
libtpu: 0.0.40
codegen_flags: <defaults>
</compile_context>

<pallas_src>
import math

import jax
import jax.numpy as jnp
from jax.experimental import pallas as pl
from jax.experimental.pallas import tpu as pltpu


def _copy_kernel(x_ref, o_ref):
    # Identity copy of one lane-dense tile -> unmasked vld/vst streams.
    o_ref[...] = x_ref[...]


def _round_down(x: int, m: int) -> int:
    return max(m, (x // m) * m)


def _sublane_pack(itemsize: int) -> int:
    # Rows per 32-bit sublane container: f32 -> 8, bf16 -> 16, int8/fp8 -> 32.
    return max(8, 32 // itemsize)


def _dense_view(n: int, flat: int, sub: int) -> tuple[int, int]:
    """Pick a sublane/lane-dense 2D re-view (R, C) of the n*flat elements.

    The copy is an identity, so any row-major re-view is free and exact; we
    only use it to avoid masked partial stores when n < sublane pack or flat
    is not lane-aligned.
    """
    total = n * flat
    if flat % 128 == 0 and n % sub == 0:
        return n, flat
    fallback = None
    # Widest lane extent first (multiples of 128, capped at 8192 lanes).
    for c in range(8192, 127, -128):
        if total % c:
            continue
        r = total // c
        if r % sub == 0:
            return r, c
        if fallback is None:
            fallback = (r, c)
    if fallback is not None:
        return fallback
    return n, flat  # tiny / awkward sizes: full-extent blocks are still legal


def _pick_blocks(rows: int, cols: int, itemsize: int, sub: int,
                 target_bytes: int = 4 << 20) -> tuple[int, int]:
    """Dtype-aware block selection, ~target_bytes per block."""
    row_bytes = cols * itemsize
    if row_bytes <= target_bytes:
        # Full-row blocks: each DMA is one contiguous HBM strip.
        block_cols = cols
        if rows * row_bytes <= target_bytes:
            block_rows = rows
        else:
            block_rows = min(rows, _round_down(target_bytes // row_bytes, sub))
    else:
        # Very wide rows: narrow-row, lane-dense tiles.
        block_rows = min(rows, sub)
        block_cols = min(cols, _round_down(target_bytes // (block_rows * itemsize), 128))

    # v7x: ensure >=2 blocks along a parallel axis so both TensorCores get
    # work (no-op on 1-TC v5e/v6e, and on tiny inputs).
    if block_rows == rows and block_cols == cols and rows >= 2 * sub:
        block_rows = min(rows, _round_down(pl.cdiv(rows, 2), sub))
    return block_rows, block_cols


def flatten(x: jax.Array, *, use_kernel: bool = True) -> jax.Array:
    """Equivalent of `input.reshape(input.size(0), -1)`.

    use_kernel=False is the recommended standalone path (metadata-only, zero
    HBM traffic). use_kernel=True routes through a Pallas memcpy so the op can
    live inside a Pallas pipeline / be benchmarked as one.
    """
    n = x.shape[0]
    flat = math.prod(x.shape[1:]) if len(x.shape) > 1 else 1

    if not use_kernel:
        return x.reshape(n, flat)

    itemsize = jnp.dtype(x.dtype).itemsize
    sub = _sublane_pack(itemsize)

    # Free, metadata-only re-view into a sublane/lane-dense slab.
    rows_v, cols_v = _dense_view(n, flat, sub)
    x2 = x.reshape(rows_v, cols_v)

    block_rows, block_cols = _pick_blocks(rows_v, cols_v, itemsize, sub)

    if block_cols == cols_v:
        # 1-D grid over full-row strips.
        grid = (pl.cdiv(rows_v, block_rows),)
        in_specs = [pl.BlockSpec((block_rows, cols_v), lambda i: (i, 0))]
        out_specs = pl.BlockSpec((block_rows, cols_v), lambda i: (i, 0))
        dim_sem = ("parallel",)
    else:
        grid = (pl.cdiv(rows_v, block_rows), pl.cdiv(cols_v, block_cols))
        in_specs = [pl.BlockSpec((block_rows, block_cols), lambda i, j: (i, j))]
        out_specs = pl.BlockSpec((block_rows, block_cols), lambda i, j: (i, j))
        dim_sem = ("parallel", "parallel")

    y2 = pl.pallas_call(
        _copy_kernel,
        out_shape=jax.ShapeDtypeStruct((rows_v, cols_v), x.dtype),
        grid_spec=pltpu.PrefetchScalarGridSpec(
            num_scalar_prefetch=0,
            grid=grid,
            in_specs=in_specs,
            out_specs=out_specs,
        ),
        compiler_params=pltpu.CompilerParams(
            dimension_semantics=dim_sem,
            # 2 x (in + out) double-buffered 4 MiB blocks = 16 MiB; 48 MiB
            # leaves headroom yet stays under v7x's 64 MiB physical VMEM and
            # lifts v5e's 16 MiB scoped default.
            vmem_limit_bytes=48 << 20,
        ),
        cost_estimate=pl.CostEstimate(
            flops=0,
            transcendentals=0,
            bytes_accessed=2 * rows_v * cols_v * itemsize,
        ),
    )(x2)

    # Metadata-only reshape back to the flatten output shape.
    return y2.reshape(n, flat)


if __name__ == "__main__":
    key = jax.random.PRNGKey(0)

    # Small NCHW input consistent with typical conv feature maps.
    x = jax.random.normal(key, (2, 4, 16, 16), dtype=jnp.float32)

    y = flatten(x)                       # kernel path
    y = jax.block_until_ready(y)
    y_ref = x.reshape(x.shape[0], -1)    # reference semantics (torch .reshape(N, -1))
    assert y.shape == (2, 4 * 16 * 16), y.shape
    assert jnp.array_equal(y, y_ref), "f32 mismatch vs reference reshape"

    # Fast (reshape-only) path gives identical results.
    y_fast = jax.block_until_ready(flatten(x, use_kernel=False))
    assert jnp.array_equal(y_fast, y_ref), "fast-path mismatch"

    # Exercise the dtype-aware path with a sub-32-bit dtype.
    xb = x.astype(jnp.bfloat16)
    yb = jax.block_until_ready(flatten(xb))
    assert jnp.array_equal(yb, xb.reshape(2, -1)), "bf16 mismatch vs reference reshape"

    print("KERNEL_OK")
</pallas_src>

<mosaic_0001>
module attributes {stable_mosaic.version = 11 : i64} {
  func.func @_copy_kernel(%arg0: i32, %arg1: memref<8x256xf32, #tpu.memory_space<vmem>>, %arg2: memref<8x256xf32, #tpu.memory_space<vmem>>) attributes {dimension_semantics = [#tpu.dimension_semantics<parallel>], iteration_bounds = array<i64: 1>, scalar_prefetch = 0 : i64, scratch_operands = 0 : i64, tpu.core_type = #tpu.core_type<tc>, window_params = [{transform_indices = @transform_0, window_bounds = array<i64: 8, 256>}, {transform_indices = @transform_1, window_bounds = array<i64: 8, 256>}]} {
    %c0 = arith.constant 0 : index
    %c0_0 = arith.constant 0 : index
    %0 = vector.load %arg1[%c0, %c0_0] : memref<8x256xf32, #tpu.memory_space<vmem>>, vector<8x256xf32>
    %c0_1 = arith.constant 0 : index
    %c0_2 = arith.constant 0 : index
    %1 = vector.load %arg2[%c0_1, %c0_2] : memref<8x256xf32, #tpu.memory_space<vmem>>, vector<8x256xf32>
    tpu.vector_store %arg2[%c0_1, %c0_2], %0 {strides = array<i32>} : memref<8x256xf32, #tpu.memory_space<vmem>>, vector<8x256xf32>,
    return
  }
  func.func @transform_0(%arg0: i32) -> (i32, i32) {
    %c0_i32 = arith.constant 0 : i32
    %c0_i32_0 = arith.constant 0 : i32
    return %arg0, %c0_i32 : i32, i32
  }
  func.func @transform_1(%arg0: i32) -> (i32, i32) {
    %c0_i32 = arith.constant 0 : i32
    %c0_i32_0 = arith.constant 0 : i32
    return %arg0, %c0_i32 : i32, i32
  }
}

</mosaic_0001>

<llo_original>
// kernel: tpu_custom_call.1
$region0: #{tpu_custom_call.1}
  #allocation0 [shape = 'u32[]', space=smem, size = 0x4, offset = 0x4, fixed_abs, tag = 'smem constant byte address 0x4 - core index']
  #allocation1 [shape = 'u32[144,128]{1,0:T(1,128)}', space=vmem, size = 0x12000, scoped, tag = 'internal scratch']
  %s0 = inlined_call_operand.hbm [shape: f32[8,256], index: 0, kind: input, shape index: {}]
  %s1 = inlined_call_operand.hbm [shape: f32[8,256], index: 1, kind: output, shape index: {}]
  %s2 = sld [smem:[#allocation0]]
  $region18: #{tpu_custom_call.1} parent=0
    _
  %s4 = ssub.s32 1, %s2
  %s5 = scalar_select 0, %s4, %s2
  $region1: #{tpu_custom_call.1} parent=0
    #allocation2 [shape = 'u8[8192]{0}', space=vmem, size = 0x2000, scoped, tag = 'input window, operand 0, single buffered']
    #allocation3 [shape = 's32[1]{0}', space=sflag, size = 0x4, scoped, tag = 'scoped memory for tpu_custom_call.1']
    #allocation4 [shape = 's32[1]{0}', space=sflag, size = 0x4, scoped, tag = 'scoped memory for tpu_custom_call.1']
    #allocation5 [shape = 'u8[8192]{0}', space=vmem, size = 0x2000, scoped, tag = 'output window, operand 0, single buffered']
    %6 = vsyncpa [#allocation3], 0
    %7 = vsyncpa [#allocation4], 0
    // Predicated region
    $region2: #{tpu_custom_call.1} parent=1 // pred_check
      _
    $region3: #{tpu_custom_call.1} parent=1 // pred_check_branch
      %9 = sbr.rel (0) target = $region5
    $region4: #{tpu_custom_call.1} parent=1 // pred_region
      %s11 = ssub.s32 256, 256
      %12 = vsyncadd [#allocation3], %s11
      %s14 = sshll.u32 [#allocation2], 4
      %s15 = int_to_ptr.vmem [resolvable:$true] %s14
      %17 = dma.hbm_to_vmem [thread:$0]  %s0, 256, %s15, [#allocation3]
    $region5: #{tpu_custom_call.1} parent=1 // pred_fallthru
      _
    // Predicated region
    $region6: #{tpu_custom_call.1} parent=1 // pred_check
      _
    $region7: #{tpu_custom_call.1} parent=1 // pred_check_branch
      %19 = sbr.rel (0) target = $region9
    $region8: #{tpu_custom_call.1} parent=1 // pred_region
      %20 = dma.done [#allocation3], 256
    $region9: #{tpu_custom_call.1} parent=1 // pred_fallthru
      _
    %v21 = vld [vmem:[#allocation2] sm:$0xff]
    %v22 = vld [vmem:[#allocation2 + $0x8] sm:$0xff]
    %23 = vst [vmem:[#allocation5] sm:$0xff] %v21
    %24 = vst [vmem:[#allocation5 + $0x8] sm:$0xff] %v22
    // Predicated region
    $region10: #{tpu_custom_call.1} parent=1 // pred_check
      _
    $region11: #{tpu_custom_call.1} parent=1 // pred_check_branch
      %26 = sbr.rel (0) target = $region13
    $region12: #{tpu_custom_call.1} parent=1 // pred_region
      %s28 = ssub.s32 256, 256
      %29 = vsyncadd [#allocation4], %s28
      %s31 = sshll.u32 [#allocation5], 4
      %s32 = int_to_ptr.vmem [resolvable:$true] %s31
      %34 = dma.vmem_to_hbm [thread:$0]  %s32, 256, %s1, [#allocation4]
    $region13: #{tpu_custom_call.1} parent=1 // pred_fallthru
      _
    // Predicated region
    $region14: #{tpu_custom_call.1} parent=1 // pred_check
      _
    $region15: #{tpu_custom_call.1} parent=1 // pred_check_branch
      %36 = sbr.rel (0) target = $region17
    $region16: #{tpu_custom_call.1} parent=1 // pred_region
      %37 = dma.done [#allocation4], 256
    $region17: #{tpu_custom_call.1} parent=1 // pred_fallthru
      _
    %38 = vsyncpa [#allocation3], 1
    %39 = vsyncpa [#allocation4], 1

</llo_original>
